<compile_context>
chip_gen: v7x
topology: tpu7x:2x2x1
jax: 0.10.0
libtpu: 0.0.40
codegen_flags: <defaults>
</compile_context>

<pallas_src>
import functools

import jax
import jax.numpy as jnp
from jax.experimental import pallas as pl
from jax.experimental.pallas import tpu as pltpu

IN_FEATURES = 784
PAD = 128                 # lane-dense padded width for hidden dims
NUM_CLASSES = 10
TILE_M_DEFAULT = 2048
VMEM_LIMIT_BYTES = 48 * 1024 * 1024


def _round_up(n, m):
    return ((n + m - 1) // m) * m


def _pad2d(a, rows, cols):
    r, c = a.shape
    return jnp.pad(a, ((0, rows - r), (0, cols - c)))


def _mlp_kernel(x_ref, w0_ref, b0_ref, w1_ref, w3_ref, b3_ref,
                w5_ref, w7_ref, o_ref, *, compute_dtype):
    cdt = compute_dtype
    x = x_ref[...].astype(cdt)          # cast (f32 -> bf16) inside the kernel

    def sigmoid(v):                      # sigmoid(x) = 0.5*(tanh(0.5x)+1): 1 EUP op
        return 0.5 * jnp.tanh(0.5 * v) + 0.5

    # f0: Linear(784 -> 59, bias)   [padded to 128 lanes]
    h = jnp.dot(x, w0_ref[...], preferred_element_type=jnp.float32) + b0_ref[...]
    # f1: Linear(59 -> 53, no bias) ; f2: Sigmoid
    h = jnp.dot(h.astype(cdt), w1_ref[...], preferred_element_type=jnp.float32)
    h = sigmoid(h)
    # f3: Linear(53 -> 42, bias)    ; f4: Sigmoid
    h = jnp.dot(h.astype(cdt), w3_ref[...], preferred_element_type=jnp.float32) + b3_ref[...]
    h = sigmoid(h)
    # f5: Linear(42 -> 29, no bias) ; f6: Sigmoid
    h = jnp.dot(h.astype(cdt), w5_ref[...], preferred_element_type=jnp.float32)
    h = sigmoid(h)
    # f7: Linear(29 -> 10, no bias)
    logits = jnp.dot(h.astype(cdt), w7_ref[...], preferred_element_type=jnp.float32)

    # f8: LogSoftmax over the 10 real classes (padded lanes masked out).
    col = jax.lax.broadcasted_iota(jnp.int32, logits.shape, 1)
    logits = jnp.where(col < NUM_CLASSES, logits, jnp.float32(-1e30))
    m = jnp.max(logits, axis=-1, keepdims=True)
    e = jnp.exp(logits - m)
    lse = jnp.log(jnp.sum(e, axis=-1, keepdims=True))
    out = logits - m - lse
    o_ref[...] = out[:, :NUM_CLASSES].astype(o_ref.dtype)


def linear_sigmoid_16(x, params, *, compute_dtype=jnp.bfloat16,
                      tile_m=TILE_M_DEFAULT):
    """x: (B, 1, 28, 28). Returns (B, 10) log-probabilities (float32)."""
    B = x.shape[0]
    x2d = x.reshape(B, IN_FEATURES)              # keep incoming dtype (no wrapper cast)

    # Pad batch only up to the sublane multiple (8) -- tiny / usually a no-op.
    b_pad = _round_up(B, 8)
    if b_pad != B:
        x2d = jnp.pad(x2d, ((0, b_pad - B), (0, 0)))

    # Batch tile: big enough to amortize per-step overhead; keep >= 2 grid
    # steps for larger batches so both v7x TensorCores get work.
    tm = min(tile_m, b_pad)
    if b_pad >= 512 and pl.cdiv(b_pad, tm) < 2:
        tm = _round_up(pl.cdiv(b_pad, 2), 8)
    grid = (pl.cdiv(b_pad, tm),)

    # Pad weights/biases to lane-dense 128 once, outside the kernel.
    w0, b0, w1, w3, b3, w5, w7 = params
    w0p = _pad2d(w0, IN_FEATURES, PAD).astype(compute_dtype)
    b0p = _pad2d(b0, 1, PAD).astype(jnp.float32)
    w1p = _pad2d(w1, PAD, PAD).astype(compute_dtype)
    w3p = _pad2d(w3, PAD, PAD).astype(compute_dtype)
    b3p = _pad2d(b3, 1, PAD).astype(jnp.float32)
    w5p = _pad2d(w5, PAD, PAD).astype(compute_dtype)
    w7p = _pad2d(w7, PAD, PAD).astype(compute_dtype)

    def resident(shape):
        return pl.BlockSpec(shape, lambda i: (0, 0))   # VMEM-resident across grid

    in_specs = [
        pl.BlockSpec((tm, IN_FEATURES), lambda i: (i, 0)),   # x: tiled over batch
        resident((IN_FEATURES, PAD)),                        # w0
        resident((1, PAD)),                                  # b0
        resident((PAD, PAD)),                                # w1
        resident((PAD, PAD)),                                # w3
        resident((1, PAD)),                                  # b3
        resident((PAD, PAD)),                                # w5
        resident((PAD, PAD)),                                # w7
    ]
    out_spec = pl.BlockSpec((tm, NUM_CLASSES), lambda i: (i, 0))

    operands = (x2d, w0p, b0p, w1p, w3p, b3p, w5p, w7p)
    weight_bytes = sum(int(a.size) * a.dtype.itemsize for a in operands[1:])
    cost = pl.CostEstimate(
        flops=2 * b_pad * (IN_FEATURES * PAD + 4 * PAD * PAD),
        transcendentals=b_pad * 4 * PAD,
        bytes_accessed=int(x2d.size) * x2d.dtype.itemsize
        + weight_bytes + b_pad * NUM_CLASSES * 4,
    )

    kernel = functools.partial(_mlp_kernel, compute_dtype=compute_dtype)
    out = pl.pallas_call(
        kernel,
        out_shape=jax.ShapeDtypeStruct((b_pad, NUM_CLASSES), jnp.float32),
        grid=grid,
        in_specs=in_specs,
        out_specs=out_spec,
        compiler_params=pltpu.CompilerParams(
            dimension_semantics=("parallel",),
            vmem_limit_bytes=VMEM_LIMIT_BYTES),
        cost_estimate=cost,
    )(*operands)

    return out[:B]    # row slice only (no-op when B is already a multiple of 8)


def init_params(key):
    """Deterministic init matching nn.Linear shapes (stored as (in, out))."""
    ks = jax.random.split(key, 7)

    def uniform(k, shape, fan_in):
        bound = 1.0 / jnp.sqrt(fan_in)
        return jax.random.uniform(k, shape, jnp.float32, -bound, bound)

    w0 = uniform(ks[0], (784, 59), 784.0)
    b0 = uniform(ks[1], (1, 59), 784.0)
    w1 = uniform(ks[2], (59, 53), 59.0)
    w3 = uniform(ks[3], (53, 42), 53.0)
    b3 = uniform(ks[4], (1, 42), 53.0)
    w5 = uniform(ks[5], (42, 29), 42.0)
    w7 = uniform(ks[6], (29, 10), 29.0)
    return (w0, b0, w1, w3, b3, w5, w7)


def reference(x, params):
    """Pure-JAX f32 reference."""
    w0, b0, w1, w3, b3, w5, w7 = params
    h = x.reshape(x.shape[0], 784)
    h = h @ w0 + b0
    h = jax.nn.sigmoid(h @ w1)
    h = jax.nn.sigmoid(h @ w3 + b3)
    h = jax.nn.sigmoid(h @ w5)
    logits = h @ w7
    return jax.nn.log_softmax(logits, axis=1)


if __name__ == "__main__":
    key = jax.random.PRNGKey(0)
    k_x, k_p = jax.random.split(key)

    B = 2
    x = jax.random.normal(k_x, (B, 1, 28, 28), jnp.float32)  # NCHW, 1*28*28 = 784
    params = init_params(k_p)

    ref = jax.block_until_ready(reference(x, params))

    # f32 path: checks the fused kernel math (tanh-based sigmoid is the same
    # function, so only tiny numerical differences remain).
    out_f32 = jax.block_until_ready(
        linear_sigmoid_16(x, params, compute_dtype=jnp.float32))
    assert out_f32.shape == (B, NUM_CLASSES)
    assert jnp.allclose(out_f32, ref, atol=1e-4, rtol=1e-4)

    # bf16 matmul-operand path (default): looser tolerance.
    out_bf16 = jax.block_until_ready(linear_sigmoid_16(x, params))
    assert out_bf16.shape == (B, NUM_CLASSES)
    assert jnp.allclose(out_bf16, ref, atol=3e-2, rtol=3e-2)

    print("KERNEL_OK")
</pallas_src>

<mosaic_0001>
module attributes {stable_mosaic.version = 11 : i64} {
  func.func @_mlp_kernel(%arg0: i32, %arg1: memref<8x784xf32, #tpu.memory_space<vmem>>, %arg2: memref<784x128xf32, #tpu.memory_space<vmem>>, %arg3: memref<1x128xf32, #tpu.memory_space<vmem>>, %arg4: memref<128x128xf32, #tpu.memory_space<vmem>>, %arg5: memref<128x128xf32, #tpu.memory_space<vmem>>, %arg6: memref<1x128xf32, #tpu.memory_space<vmem>>, %arg7: memref<128x128xf32, #tpu.memory_space<vmem>>, %arg8: memref<128x128xf32, #tpu.memory_space<vmem>>, %arg9: memref<8x10xf32, #tpu.memory_space<vmem>>) attributes {dimension_semantics = [#tpu.dimension_semantics<parallel>], iteration_bounds = array<i64: 1>, scalar_prefetch = 0 : i64, scratch_operands = 0 : i64, tpu.core_type = #tpu.core_type<tc>, window_params = [{transform_indices = @transform_0, window_bounds = array<i64: 8, 784>}, {pipeline_mode = #tpu.pipeline_mode<synchronous>, transform_indices = @transform_1, window_bounds = array<i64: 784, 128>}, {pipeline_mode = #tpu.pipeline_mode<synchronous>, transform_indices = @transform_2, window_bounds = array<i64: 1, 128>}, {pipeline_mode = #tpu.pipeline_mode<synchronous>, transform_indices = @transform_3, window_bounds = array<i64: 128, 128>}, {pipeline_mode = #tpu.pipeline_mode<synchronous>, transform_indices = @transform_4, window_bounds = array<i64: 128, 128>}, {pipeline_mode = #tpu.pipeline_mode<synchronous>, transform_indices = @transform_5, window_bounds = array<i64: 1, 128>}, {pipeline_mode = #tpu.pipeline_mode<synchronous>, transform_indices = @transform_6, window_bounds = array<i64: 128, 128>}, {pipeline_mode = #tpu.pipeline_mode<synchronous>, transform_indices = @transform_7, window_bounds = array<i64: 128, 128>}, {transform_indices = @transform_8, window_bounds = array<i64: 8, 10>}]} {
    %c0 = arith.constant 0 : index
    %c0_0 = arith.constant 0 : index
    %0 = vector.load %arg1[%c0, %c0_0] : memref<8x784xf32, #tpu.memory_space<vmem>>, vector<8x784xf32>
    %c0_1 = arith.constant 0 : index
    %c0_2 = arith.constant 0 : index
    %1 = vector.load %arg2[%c0_1, %c0_2] : memref<784x128xf32, #tpu.memory_space<vmem>>, vector<784x128xf32>
    %cst = arith.constant dense<0.000000e+00> : vector<8x128xf32>
    %2 = tpu.matmul %0, %1, %cst {dimension_numbers = #tpu.dot_dimension_numbers<[1], [0], [0], [1], [0, 0, 1, 1], [], []>} : vector<8x784xf32>, vector<784x128xf32>, vector<8x128xf32> -> vector<8x128xf32>
    %c0_3 = arith.constant 0 : index
    %c0_4 = arith.constant 0 : index
    %3 = vector.load %arg3[%c0_3, %c0_4] : memref<1x128xf32, #tpu.memory_space<vmem>>, vector<1x128xf32>
    %4 = vector.broadcast %3 : vector<1x128xf32> to vector<8x128xf32>
    %5 = arith.addf %2, %4 : vector<8x128xf32>
    %c0_5 = arith.constant 0 : index
    %c0_6 = arith.constant 0 : index
    %6 = vector.load %arg4[%c0_5, %c0_6] : memref<128x128xf32, #tpu.memory_space<vmem>>, vector<128x128xf32>
    %cst_7 = arith.constant dense<0.000000e+00> : vector<8x128xf32>
    %7 = tpu.matmul %5, %6, %cst_7 {dimension_numbers = #tpu.dot_dimension_numbers<[1], [0], [0], [1], [0, 0, 1, 1], [], []>} : vector<8x128xf32>, vector<128x128xf32>, vector<8x128xf32> -> vector<8x128xf32>
    %cst_8 = arith.constant 5.000000e-01 : f32
    %8 = vector.broadcast %cst_8 : f32 to vector<8x128xf32>
    %9 = arith.mulf %8, %7 : vector<8x128xf32>
    %10 = math.tanh %9 : vector<8x128xf32>
    %cst_9 = arith.constant 5.000000e-01 : f32
    %11 = vector.broadcast %cst_9 : f32 to vector<8x128xf32>
    %12 = arith.mulf %11, %10 : vector<8x128xf32>
    %cst_10 = arith.constant 5.000000e-01 : f32
    %13 = vector.broadcast %cst_10 : f32 to vector<8x128xf32>
    %14 = arith.addf %12, %13 : vector<8x128xf32>
    %c0_11 = arith.constant 0 : index
    %c0_12 = arith.constant 0 : index
    %15 = vector.load %arg5[%c0_11, %c0_12] : memref<128x128xf32, #tpu.memory_space<vmem>>, vector<128x128xf32>
    %cst_13 = arith.constant dense<0.000000e+00> : vector<8x128xf32>
    %16 = tpu.matmul %14, %15, %cst_13 {dimension_numbers = #tpu.dot_dimension_numbers<[1], [0], [0], [1], [0, 0, 1, 1], [], []>} : vector<8x128xf32>, vector<128x128xf32>, vector<8x128xf32> -> vector<8x128xf32>
    %c0_14 = arith.constant 0 : index
    %c0_15 = arith.constant 0 : index
    %17 = vector.load %arg6[%c0_14, %c0_15] : memref<1x128xf32, #tpu.memory_space<vmem>>, vector<1x128xf32>
    %18 = vector.broadcast %17 : vector<1x128xf32> to vector<8x128xf32>
    %19 = arith.addf %16, %18 : vector<8x128xf32>
    %cst_16 = arith.constant 5.000000e-01 : f32
    %20 = vector.broadcast %cst_16 : f32 to vector<8x128xf32>
    %21 = arith.mulf %20, %19 : vector<8x128xf32>
    %22 = math.tanh %21 : vector<8x128xf32>
    %cst_17 = arith.constant 5.000000e-01 : f32
    %23 = vector.broadcast %cst_17 : f32 to vector<8x128xf32>
    %24 = arith.mulf %23, %22 : vector<8x128xf32>
    %cst_18 = arith.constant 5.000000e-01 : f32
    %25 = vector.broadcast %cst_18 : f32 to vector<8x128xf32>
    %26 = arith.addf %24, %25 : vector<8x128xf32>
    %c0_19 = arith.constant 0 : index
    %c0_20 = arith.constant 0 : index
    %27 = vector.load %arg7[%c0_19, %c0_20] : memref<128x128xf32, #tpu.memory_space<vmem>>, vector<128x128xf32>
    %cst_21 = arith.constant dense<0.000000e+00> : vector<8x128xf32>
    %28 = tpu.matmul %26, %27, %cst_21 {dimension_numbers = #tpu.dot_dimension_numbers<[1], [0], [0], [1], [0, 0, 1, 1], [], []>} : vector<8x128xf32>, vector<128x128xf32>, vector<8x128xf32> -> vector<8x128xf32>
    %cst_22 = arith.constant 5.000000e-01 : f32
    %29 = vector.broadcast %cst_22 : f32 to vector<8x128xf32>
    %30 = arith.mulf %29, %28 : vector<8x128xf32>
    %31 = math.tanh %30 : vector<8x128xf32>
    %cst_23 = arith.constant 5.000000e-01 : f32
    %32 = vector.broadcast %cst_23 : f32 to vector<8x128xf32>
    %33 = arith.mulf %32, %31 : vector<8x128xf32>
    %cst_24 = arith.constant 5.000000e-01 : f32
    %34 = vector.broadcast %cst_24 : f32 to vector<8x128xf32>
    %35 = arith.addf %33, %34 : vector<8x128xf32>
    %c0_25 = arith.constant 0 : index
    %c0_26 = arith.constant 0 : index
    %36 = vector.load %arg8[%c0_25, %c0_26] : memref<128x128xf32, #tpu.memory_space<vmem>>, vector<128x128xf32>
    %cst_27 = arith.constant dense<0.000000e+00> : vector<8x128xf32>
    %37 = tpu.matmul %35, %36, %cst_27 {dimension_numbers = #tpu.dot_dimension_numbers<[1], [0], [0], [1], [0, 0, 1, 1], [], []>} : vector<8x128xf32>, vector<128x128xf32>, vector<8x128xf32> -> vector<8x128xf32>
    %38 = tpu.iota {dimensions = array<i32: 1>} : vector<8x128xi32>
    %c10_i32 = arith.constant 10 : i32
    %39 = vector.broadcast %c10_i32 : i32 to vector<8x128xi32>
    %40 = arith.cmpi slt, %38, %39 : vector<8x128xi32>
    %cst_28 = arith.constant -1.000000e+30 : f32
    %41 = vector.broadcast %cst_28 : f32 to vector<8x128xf32>
    %42 = arith.select %40, %37, %41 : vector<8x128xi1>, vector<8x128xf32>
    %cst_29 = arith.constant dense<0xFF800000> : vector<8xf32>
    %43 = vector.multi_reduction <maximumf>, %42, %cst_29 [1] : vector<8x128xf32> to vector<8xf32>
    %44 = vector.shape_cast %43 : vector<8xf32> to vector<8x1xf32>
    %45 = vector.broadcast %44 : vector<8x1xf32> to vector<8x128xf32>
    %46 = arith.subf %42, %45 : vector<8x128xf32>
    %47 = math.exp %46 : vector<8x128xf32>
    %cst_30 = arith.constant dense<0.000000e+00> : vector<8xf32>
    %48 = vector.multi_reduction <add>, %47, %cst_30 [1] : vector<8x128xf32> to vector<8xf32>
    %49 = vector.shape_cast %48 : vector<8xf32> to vector<8x1xf32>
    %50 = math.log %49 : vector<8x1xf32>
    %51 = vector.broadcast %44 : vector<8x1xf32> to vector<8x128xf32>
    %52 = arith.subf %42, %51 : vector<8x128xf32>
    %53 = vector.broadcast %50 : vector<8x1xf32> to vector<8x128xf32>
    %54 = arith.subf %52, %53 : vector<8x128xf32>
    %55 = vector.extract_strided_slice %54 {offsets = [0, 0], sizes = [8, 10], strides = [1, 1]} : vector<8x128xf32> to vector<8x10xf32>
    %c0_31 = arith.constant 0 : index
    %c0_32 = arith.constant 0 : index
    %56 = vector.load %arg9[%c0_31, %c0_32] : memref<8x10xf32, #tpu.memory_space<vmem>>, vector<8x10xf32>
    tpu.vector_store %arg9[%c0_31, %c0_32], %55 {strides = array<i32>} : memref<8x10xf32, #tpu.memory_space<vmem>>, vector<8x10xf32>,
    return
  }
  func.func @transform_0(%arg0: i32) -> (i32, i32) {
    %c0_i32 = arith.constant 0 : i32
    %c0_i32_0 = arith.constant 0 : i32
    return %arg0, %c0_i32 : i32, i32
  }
  func.func @transform_1(%arg0: i32) -> (i32, i32) {
    %c0_i32 = arith.constant 0 : i32
    %c0_i32_0 = arith.constant 0 : i32
    %c0_i32_1 = arith.constant 0 : i32
    return %c0_i32, %c0_i32_0 : i32, i32
  }
  func.func @transform_2(%arg0: i32) -> (i32, i32) {
    %c0_i32 = arith.constant 0 : i32
    %c0_i32_0 = arith.constant 0 : i32
    %c0_i32_1 = arith.constant 0 : i32
    return %c0_i32, %c0_i32_0 : i32, i32
  }
  func.func @transform_3(%arg0: i32) -> (i32, i32) {
    %c0_i32 = arith.constant 0 : i32
    %c0_i32_0 = arith.constant 0 : i32
    %c0_i32_1 = arith.constant 0 : i32
    return %c0_i32, %c0_i32_0 : i32, i32
  }
  func.func @transform_4(%arg0: i32) -> (i32, i32) {
    %c0_i32 = arith.constant 0 : i32
    %c0_i32_0 = arith.constant 0 : i32
    %c0_i32_1 = arith.constant 0 : i32
    return %c0_i32, %c0_i32_0 : i32, i32
  }
  func.func @transform_5(%arg0: i32) -> (i32, i32) {
    %c0_i32 = arith.constant 0 : i32
    %c0_i32_0 = arith.constant 0 : i32
    %c0_i32_1 = arith.constant 0 : i32
    return %c0_i32, %c0_i32_0 : i32, i32
  }
  func.func @transform_6(%arg0: i32) -> (i32, i32) {
    %c0_i32 = arith.constant 0 : i32
    %c0_i32_0 = arith.constant 0 : i32
    %c0_i32_1 = arith.constant 0 : i32
    return %c0_i32, %c0_i32_0 : i32, i32
  }
  func.func @transform_7(%arg0: i32) -> (i32, i32) {
    %c0_i32 = arith.constant 0 : i32
    %c0_i32_0 = arith.constant 0 : i32
    %c0_i32_1 = arith.constant 0 : i32
    return %c0_i32, %c0_i32_0 : i32, i32
  }
  func.func @transform_8(%arg0: i32) -> (i32, i32) {
    %c0_i32 = arith.constant 0 : i32
    %c0_i32_0 = arith.constant 0 : i32
    return %arg0, %c0_i32 : i32, i32
  }
}

</mosaic_0001>

<llo_original>
// kernel: tpu_custom_call.1
$region0: #{tpu_custom_call.1}
  #allocation0 [shape = 'u32[]', space=smem, size = 0x4, offset = 0x4, fixed_abs, tag = 'smem constant byte address 0x4 - core index']
  #allocation1 [shape = 'u32[144,128]{1,0:T(1,128)}', space=vmem, size = 0x12000, scoped, tag = 'internal scratch']
  %s0 = inlined_call_operand.hbm [shape: f32[8,784], index: 0, kind: input, shape index: {}]
  %s1 = inlined_call_operand.hbm [shape: f32[784,128], index: 1, kind: input, shape index: {}]
  %s2 = inlined_call_operand.vmem [shape: f32[1,128], index: 2, kind: input, shape index: {}]
  %s3 = inlined_call_operand.hbm [shape: f32[128,128], index: 3, kind: input, shape index: {}]
  %s4 = inlined_call_operand.hbm [shape: f32[128,128], index: 4, kind: input, shape index: {}]
  %s5 = inlined_call_operand.vmem [shape: f32[1,128], index: 5, kind: input, shape index: {}]
  %s6 = inlined_call_operand.hbm [shape: f32[128,128], index: 6, kind: input, shape index: {}]
  %s7 = inlined_call_operand.hbm [shape: f32[128,128], index: 7, kind: input, shape index: {}]
  %s8 = inlined_call_operand.hbm [shape: f32[8,10], index: 8, kind: output, shape index: {}]
  %s9 = sld [smem:[#allocation0]]
  $region66: #{tpu_custom_call.1} parent=0
    _
  %s11 = ssub.s32 1, %s9
  %s12 = scalar_select 0, %s11, %s9
  $region1: #{tpu_custom_call.1} parent=0
    #allocation2 [shape = 'u8[28672]{0}', space=vmem, size = 0x7000, scoped, tag = 'input window, operand 0, single buffered']
    #allocation3 [shape = 's32[1]{0}', space=sflag, size = 0x4, scoped, tag = 'scoped memory for tpu_custom_call.1']
    #allocation4 [shape = 's32[1]{0}', space=sflag, size = 0x4, scoped, tag = 'scoped memory for tpu_custom_call.1']
    #allocation5 [shape = 'u8[401408]{0}', space=vmem, size = 0x62000, scoped, tag = 'input window, operand 1, single buffered']
    #allocation6 [shape = 's32[1]{0}', space=sflag, size = 0x4, scoped, tag = 'scoped memory for tpu_custom_call.1']
    #allocation7 [shape = 'u8[65536]{0}', space=vmem, size = 0x10000, scoped, tag = 'input window, operand 3, single buffered']
    #allocation8 [shape = 'u8[65536]{0}', space=vmem, size = 0x10000, scoped, tag = 'input window, operand 4, single buffered']
    #allocation9 [shape = 's32[1]{0}', space=sflag, size = 0x4, scoped, tag = 'scoped memory for tpu_custom_call.1']
    #allocation10 [shape = 'u8[65536]{0}', space=vmem, size = 0x10000, scoped, tag = 'input window, operand 6, single buffered']
    #allocation11 [shape = 'u8[65536]{0}', space=vmem, size = 0x10000, scoped, tag = 'input window, operand 7, single buffered']
    #allocation12 [shape = 's32[1]{0}', space=sflag, size = 0x4, scoped, tag = 'scoped memory for tpu_custom_call.1']
    #allocation13 [shape = 'u8[4096]{0}', space=vmem, size = 0x1000, scoped, tag = 'output window, operand 0, single buffered']
    %13 = vsyncpa [#allocation3], 0
    %14 = vsyncpa [#allocation6], 0
    %15 = vsyncpa [#allocation9], 0
    %16 = vsyncpa [#allocation12], 0
    %17 = vsyncpa [#allocation4], 0
    // Predicated region
    $region2: #{tpu_custom_call.1} parent=1 // pred_check
      _
    $region3: #{tpu_custom_call.1} parent=1 // pred_check_branch
      %19 = sbr.rel (0) target = $region5
    $region4: #{tpu_custom_call.1} parent=1 // pred_region
      %s21 = ssub.s32 896, 896
      %22 = vsyncadd [#allocation3], %s21
      %s24 = sshll.u32 [#allocation2], 4
      %s25 = int_to_ptr.vmem [resolvable:$true] %s24
      %27 = dma.hbm_to_vmem [thread:$0]  %s0, 896, %s25, [#allocation3]
    $region5: #{tpu_custom_call.1} parent=1 // pred_fallthru
      _
    // Predicated region
    $region6: #{tpu_custom_call.1} parent=1 // pred_check
      _
    $region7: #{tpu_custom_call.1} parent=1 // pred_check_branch
      %29 = sbr.rel (0) target = $region9
    $region8: #{tpu_custom_call.1} parent=1 // pred_region
      %s31 = ssub.s32 12544, 12544
      %32 = vsyncadd [#allocation6], %s31
      %s33 = sshll.u32 [#allocation5], 4
      %s34 = int_to_ptr.vmem [resolvable:$true] %s33
      %39 = dma.hbm_to_vmem [thread:$0]  %s1, 12544, %s34, [#allocation6], 128, 128, 8
    $region9: #{tpu_custom_call.1} parent=1 // pred_fallthru
      _
    // Predicated region
    $region10: #{tpu_custom_call.1} parent=1 // pred_check
      _
    $region11: #{tpu_custom_call.1} parent=1 // pred_check_branch
      %41 = sbr.rel (0) target = $region13
    $region12: #{tpu_custom_call.1} parent=1 // pred_region
      _
    $region13: #{tpu_custom_call.1} parent=1 // pred_fallthru
      _
    // Predicated region
    $region14: #{tpu_custom_call.1} parent=1 // pred_check
      _
    $region15: #{tpu_custom_call.1} parent=1 // pred_check_branch
      %43 = sbr.rel (0) target = $region17
    $region16: #{tpu_custom_call.1} parent=1 // pred_region
      %s45 = ssub.s32 2048, 2048
      %46 = vsyncadd [#allocation6], %s45
      %s47 = sshll.u32 [#allocation7], 4
      %s48 = int_to_ptr.vmem [resolvable:$true] %s47
      %53 = dma.hbm_to_vmem [thread:$0]  %s3, 2048, %s48, [#allocation6], 128, 128, 8
    $region17: #{tpu_custom_call.1} parent=1 // pred_fallthru
      _
    // Predicated region
    $region18: #{tpu_custom_call.1} parent=1 // pred_check
      _
    $region19: #{tpu_custom_call.1} parent=1 // pred_check_branch
      %55 = sbr.rel (0) target = $region21
    $region20: #{tpu_custom_call.1} parent=1 // pred_region
      %s57 = ssub.s32 2048, 2048
      %58 = vsyncadd [#allocation9], %s57
      %s59 = sshll.u32 [#allocation8], 4
      %s60 = int_to_ptr.vmem [resolvable:$true] %s59
      %65 = dma.hbm_to_vmem [thread:$0]  %s4, 2048, %s60, [#allocation9], 128, 128, 8
    $region21: #{tpu_custom_call.1} parent=1 // pred_fallthru
      _
    // Predicated region
    $region22: #{tpu_custom_call.1} parent=1 // pred_check
      _
    $region23: #{tpu_custom_call.1} parent=1 // pred_check_branch
      %67 = sbr.rel (0) target = $region25
    $region24: #{tpu_custom_call.1} parent=1 // pred_region
      _
    $region25: #{tpu_custom_call.1} parent=1 // pred_fallthru
      _
    // Predicated region
    $region26: #{tpu_custom_call.1} parent=1 // pred_check
      _
    $region27: #{tpu_custom_call.1} parent=1 // pred_check_branch
      %69 = sbr.rel (0) target = $region29
    $region28: #{tpu_custom_call.1} parent=1 // pred_region
      %s71 = ssub.s32 2048, 2048
      %72 = vsyncadd [#allocation9], %s71
      %s73 = sshll.u32 [#allocation10], 4
      %s74 = int_to_ptr.vmem [resolvable:$true] %s73
      %79 = dma.hbm_to_vmem [thread:$0]  %s6, 2048, %s74, [#allocation9], 128, 128, 8
    $region29: #{tpu_custom_call.1} parent=1 // pred_fallthru
      _
    // Predicated region
    $region30: #{tpu_custom_call.1} parent=1 // pred_check
      _
    $region31: #{tpu_custom_call.1} parent=1 // pred_check_branch
      %81 = sbr.rel (0) target = $region33
    $region32: #{tpu_custom_call.1} parent=1 // pred_region
      %s83 = ssub.s32 2048, 2048
      %84 = vsyncadd [#allocation12], %s83
      %s85 = sshll.u32 [#allocation11], 4
      %s86 = int_to_ptr.vmem [resolvable:$true] %s85
      %91 = dma.hbm_to_vmem [thread:$0]  %s7, 2048, %s86, [#allocation12], 128, 128, 8
    $region33: #{tpu_custom_call.1} parent=1 // pred_fallthru
      _
    // Predicated region
    $region34: #{tpu_custom_call.1} parent=1 // pred_check
      _
    $region35: #{tpu_custom_call.1} parent=1 // pred_check_branch
      %93 = sbr.rel (0) target = $region37
    $region36: #{tpu_custom_call.1} parent=1 // pred_region
      %94 = dma.done [#allocation3], 896
    $region37: #{tpu_custom_call.1} parent=1 // pred_fallthru
      _
    // Predicated region
    $region38: #{tpu_custom_call.1} parent=1 // pred_check
      _
    $region39: #{tpu_custom_call.1} parent=1 // pred_check_branch
      %96 = sbr.rel (0) target = $region41
    $region40: #{tpu_custom_call.1} parent=1 // pred_region
      %97 = dma.done [#allocation6], 12544
    $region41: #{tpu_custom_call.1} parent=1 // pred_fallthru
      _
    // Predicated region
    $region42: #{tpu_custom_call.1} parent=1 // pred_check
      _
    $region43: #{tpu_custom_call.1} parent=1 // pred_check_branch
      %99 = sbr.rel (0) target = $region45
    $region44: #{tpu_custom_call.1} parent=1 // pred_region
      %100 = dma.done [#allocation6], 2048
    $region45: #{tpu_custom_call.1} parent=1 // pred_fallthru
      _
    // Predicated region
    $region46: #{tpu_custom_call.1} parent=1 // pred_check
      _
    $region47: #{tpu_custom_call.1} parent=1 // pred_check_branch
      %102 = sbr.rel (0) target = $region49
    $region48: #{tpu_custom_call.1} parent=1 // pred_region
      %103 = dma.done [#allocation9], 2048
    $region49: #{tpu_custom_call.1} parent=1 // pred_fallthru
      _
    // Predicated region
    $region50: #{tpu_custom_call.1} parent=1 // pred_check
      _
    $region51: #{tpu_custom_call.1} parent=1 // pred_check_branch
      %105 = sbr.rel (0) target = $region53
    $region52: #{tpu_custom_call.1} parent=1 // pred_region
      %106 = dma.done [#allocation9], 2048
    $region53: #{tpu_custom_call.1} parent=1 // pred_fallthru
      _
    // Predicated region
    $region54: #{tpu_custom_call.1} parent=1 // pred_check
      _
    $region55: #{tpu_custom_call.1} parent=1 // pred_check_branch
      %108 = sbr.rel (0) target = $region57
    $region56: #{tpu_custom_call.1} parent=1 // pred_region
      %109 = dma.done [#allocation12], 2048
    $region57: #{tpu_custom_call.1} parent=1 // pred_fallthru
      _
    %v110 = vld [vmem:[#allocation2] sm:$0xff]
    %v111 = vld [vmem:[#allocation2 + $0x8] sm:$0xff]
    %v112 = vld [vmem:[#allocation2 + $0x10] sm:$0xff]
    %v113 = vld [vmem:[#allocation2 + $0x18] sm:$0xff]
    %v114 = vld [vmem:[#allocation2 + $0x20] sm:$0xff]
    %v115 = vld [vmem:[#allocation2 + $0x28] sm:$0xff]
    %v116 = vld [vmem:[#allocation2 + $0x30] sm:$0xff]
    %v117 = vld [vmem:[#allocation5] sm:$0xff]
    %v118 = vld [vmem:[#allocation5 + $0x8] sm:$0xff]
    %v119 = vld [vmem:[#allocation5 + $0x10] sm:$0xff]
    %v120 = vld [vmem:[#allocation5 + $0x18] sm:$0xff]
    %v121 = vld [vmem:[#allocation5 + $0x20] sm:$0xff]
    %v122 = vld [vmem:[#allocation5 + $0x28] sm:$0xff]
    %v123 = vld [vmem:[#allocation5 + $0x30] sm:$0xff]
    %v124 = vld [vmem:[#allocation5 + $0x38] sm:$0xff]
    %v125 = vld [vmem:[#allocation5 + $0x40] sm:$0xff]
    %v126 = vld [vmem:[#allocation5 + $0x48] sm:$0xff]
    %v127 = vld [vmem:[#allocation5 + $0x50] sm:$0xff]
    %v128 = vld [vmem:[#allocation5 + $0x58] sm:$0xff]
    %v129 = vld [vmem:[#allocation5 + $0x60] sm:$0xff]
    %v130 = vld [vmem:[#allocation5 + $0x68] sm:$0xff]
    %v131 = vld [vmem:[#allocation5 + $0x70] sm:$0xff]
    %v132 = vld [vmem:[#allocation5 + $0x78] sm:$0xff]
    %v133 = vld [vmem:[#allocation5 + $0x80] sm:$0xff]
    %v134 = vld [vmem:[#allocation5 + $0x88] sm:$0xff]
    %v135 = vld [vmem:[#allocation5 + $0x90] sm:$0xff]
    %v136 = vld [vmem:[#allocation5 + $0x98] sm:$0xff]
    %v137 = vld [vmem:[#allocation5 + $0xa0] sm:$0xff]
    %v138 = vld [vmem:[#allocation5 + $0xa8] sm:$0xff]
    %v139 = vld [vmem:[#allocation5 + $0xb0] sm:$0xff]
    %v140 = vld [vmem:[#allocation5 + $0xb8] sm:$0xff]
    %v141 = vld [vmem:[#allocation5 + $0xc0] sm:$0xff]
    %v142 = vld [vmem:[#allocation5 + $0xc8] sm:$0xff]
    %v143 = vld [vmem:[#allocation5 + $0xd0] sm:$0xff]
    %v144 = vld [vmem:[#allocation5 + $0xd8] sm:$0xff]
    %v145 = vld [vmem:[#allocation5 + $0xe0] sm:$0xff]
    %v146 = vld [vmem:[#allocation5 + $0xe8] sm:$0xff]
    %v147 = vld [vmem:[#allocation5 + $0xf0] sm:$0xff]
    %v148 = vld [vmem:[#allocation5 + $0xf8] sm:$0xff]
    %v149 = vld [vmem:[#allocation5 + $0x100] sm:$0xff]
    %v150 = vld [vmem:[#allocation5 + $0x108] sm:$0xff]
    %v151 = vld [vmem:[#allocation5 + $0x110] sm:$0xff]
    %v152 = vld [vmem:[#allocation5 + $0x118] sm:$0xff]
    %v153 = vld [vmem:[#allocation5 + $0x120] sm:$0xff]
    %v154 = vld [vmem:[#allocation5 + $0x128] sm:$0xff]
    %v155 = vld [vmem:[#allocation5 + $0x130] sm:$0xff]
    %v156 = vld [vmem:[#allocation5 + $0x138] sm:$0xff]
    %v157 = vld [vmem:[#allocation5 + $0x140] sm:$0xff]
    %v158 = vld [vmem:[#allocation5 + $0x148] sm:$0xff]
    %v159 = vld [vmem:[#allocation5 + $0x150] sm:$0xff]
    %v160 = vld [vmem:[#allocation5 + $0x158] sm:$0xff]
    %v161 = vld [vmem:[#allocation5 + $0x160] sm:$0xff]
    %v162 = vld [vmem:[#allocation5 + $0x168] sm:$0xff]
    %v163 = vld [vmem:[#allocation5 + $0x170] sm:$0xff]
    %v164 = vld [vmem:[#allocation5 + $0x178] sm:$0xff]
    %v165 = vld [vmem:[#allocation5 + $0x180] sm:$0xff]
    %v166 = vld [vmem:[#allocation5 + $0x188] sm:$0xff]
    %v167 = vld [vmem:[#allocation5 + $0x190] sm:$0xff]
    %v168 = vld [vmem:[#allocation5 + $0x198] sm:$0xff]
    %v169 = vld [vmem:[#allocation5 + $0x1a0] sm:$0xff]
    %v170 = vld [vmem:[#allocation5 + $0x1a8] sm:$0xff]
    %v171 = vld [vmem:[#allocation5 + $0x1b0] sm:$0xff]
    %v172 = vld [vmem:[#allocation5 + $0x1b8] sm:$0xff]
    %v173 = vld [vmem:[#allocation5 + $0x1c0] sm:$0xff]
    %v174 = vld [vmem:[#allocation5 + $0x1c8] sm:$0xff]
    %v175 = vld [vmem:[#allocation5 + $0x1d0] sm:$0xff]
    %v176 = vld [vmem:[#allocation5 + $0x1d8] sm:$0xff]
    %v177 = vld [vmem:[#allocation5 + $0x1e0] sm:$0xff]
    %v178 = vld [vmem:[#allocation5 + $0x1e8] sm:$0xff]
    %v179 = vld [vmem:[#allocation5 + $0x1f0] sm:$0xff]
    %v180 = vld [vmem:[#allocation5 + $0x1f8] sm:$0xff]
    %v181 = vld [vmem:[#allocation5 + $0x200] sm:$0xff]
    %v182 = vld [vmem:[#allocation5 + $0x208] sm:$0xff]
    %v183 = vld [vmem:[#allocation5 + $0x210] sm:$0xff]
    %v184 = vld [vmem:[#allocation5 + $0x218] sm:$0xff]
    %v185 = vld [vmem:[#allocation5 + $0x220] sm:$0xff]
    %v186 = vld [vmem:[#allocation5 + $0x228] sm:$0xff]
    %v187 = vld [vmem:[#allocation5 + $0x230] sm:$0xff]
    %v188 = vld [vmem:[#allocation5 + $0x238] sm:$0xff]
    %v189 = vld [vmem:[#allocation5 + $0x240] sm:$0xff]
    %v190 = vld [vmem:[#allocation5 + $0x248] sm:$0xff]
    %v191 = vld [vmem:[#allocation5 + $0x250] sm:$0xff]
    %v192 = vld [vmem:[#allocation5 + $0x258] sm:$0xff]
    %v193 = vld [vmem:[#allocation5 + $0x260] sm:$0xff]
    %v194 = vld [vmem:[#allocation5 + $0x268] sm:$0xff]
    %v195 = vld [vmem:[#allocation5 + $0x270] sm:$0xff]
    %v196 = vld [vmem:[#allocation5 + $0x278] sm:$0xff]
    %v197 = vld [vmem:[#allocation5 + $0x280] sm:$0xff]
    %v198 = vld [vmem:[#allocation5 + $0x288] sm:$0xff]
    %v199 = vld [vmem:[#allocation5 + $0x290] sm:$0xff]
    %v200 = vld [vmem:[#allocation5 + $0x298] sm:$0xff]
    %v201 = vld [vmem:[#allocation5 + $0x2a0] sm:$0xff]
    %v202 = vld [vmem:[#allocation5 + $0x2a8] sm:$0xff]
    %v203 = vld [vmem:[#allocation5 + $0x2b0] sm:$0xff]
    %v204 = vld [vmem:[#allocation5 + $0x2b8] sm:$0xff]
    %v205 = vld [vmem:[#allocation5 + $0x2c0] sm:$0xff]
    %v206 = vld [vmem:[#allocation5 + $0x2c8] sm:$0xff]
    %v207 = vld [vmem:[#allocation5 + $0x2d0] sm:$0xff]
    %v208 = vld [vmem:[#allocation5 + $0x2d8] sm:$0xff]
    %v209 = vld [vmem:[#allocation5 + $0x2e0] sm:$0xff]
    %v210 = vld [vmem:[#allocation5 + $0x2e8] sm:$0xff]
    %v211 = vld [vmem:[#allocation5 + $0x2f0] sm:$0xff]
    %v212 = vld [vmem:[#allocation5 + $0x2f8] sm:$0xff]
    %v213 = vld [vmem:[#allocation5 + $0x300] sm:$0xff]
    %v214 = vld [vmem:[#allocation5 + $0x308] sm:$0xff]
    %v215 = vld [vmem:[%s2] sm:$0x1]
    %v217 = vlaneseq
    %v218 = vshrl.u32 %v217, 7
    %v219 = vsub.s32 0, %v218
    %v220 = vrot.slane %v215, %v219
    %vm222 = vcmask 130048
    %v224 = vsel %vm222, %v116, 0
    %226 = vmatprep.subr.mxu0 0.0
    %227 = vmatpush1.msra.mxu0 %v117
    %228 = vmatprep.subr.mxu0 0.0
    %229 = vmatpush1.msra.mxu0 %v118
    %230 = vmatprep.subr.mxu0 0.0
    %231 = vmatpush1.msra.mxu0 %v119
    %232 = vmatprep.subr.mxu0 0.0
    %233 = vmatpush1.msra.mxu0 %v120
    %234 = vmatprep.subr.mxu0 0.0
    %235 = vmatpush1.msra.mxu0 %v121
    %236 = vmatprep.subr.mxu0 0.0
    %237 = vmatpush1.msra.mxu0 %v122
    %238 = vmatprep.subr.mxu0 0.0
    %239 = vmatpush1.msra.mxu0 %v123
    %240 = vmatprep.subr.mxu0 0.0
    %241 = vmatpush1.msra.mxu0 %v124
    %242 = vmatprep.subr.mxu0 0.0
    %243 = vmatpush1.msra.mxu0 %v125
    %244 = vmatprep.subr.mxu0 0.0
    %245 = vmatpush1.msra.mxu0 %v126
    %246 = vmatprep.subr.mxu0 0.0
    %247 = vmatpush1.msra.mxu0 %v127
    %248 = vmatprep.subr.mxu0 0.0
    %249 = vmatpush1.msra.mxu0 %v128
    %250 = vmatprep.subr.mxu0 0.0
    %251 = vmatpush1.msra.mxu0 %v129
    %252 = vmatprep.subr.mxu0 0.0
    %253 = vmatpush1.msra.mxu0 %v130
    %254 = vmatprep.subr.mxu0 0.0
    %255 = vmatpush1.msra.mxu0 %v131
    %256 = vmatprep.subr.mxu0 0.0
    %257 = vmatpush1.msra.mxu0 %v132
    %258 = vmatprep.subr.mxu0 0.0
    %259 = vmatpush1.msra.mxu0 %v133
    %260 = vmatprep.subr.mxu0 0.0
    %261 = vmatpush1.msra.mxu0 %v134
    %262 = vmatprep.subr.mxu0 0.0
    %263 = vmatpush1.msra.mxu0 %v135
    %264 = vmatprep.subr.mxu0 0.0
    %265 = vmatpush1.msra.mxu0 %v136
    %266 = vmatprep.subr.mxu0 0.0
    %267 = vmatpush1.msra.mxu0 %v137
    %268 = vmatprep.subr.mxu0 0.0
    %269 = vmatpush1.msra.mxu0 %v138
    %270 = vmatprep.subr.mxu0 0.0
    %271 = vmatpush1.msra.mxu0 %v139
    %272 = vmatprep.subr.mxu0 0.0
    %273 = vmatpush1.msra.mxu0 %v140
    %274 = vmatprep.subr.mxu0 0.0
    %275 = vmatpush1.msra.mxu0 %v141
    %276 = vmatprep.subr.mxu0 0.0
    %277 = vmatpush1.msra.mxu0 %v142
    %278 = vmatprep.subr.mxu0 0.0
    %279 = vmatpush1.msra.mxu0 %v143
    %280 = vmatprep.subr.mxu0 0.0
    %281 = vmatpush1.msra.mxu0 %v144
    %282 = vmatprep.subr.mxu0 0.0
    %283 = vmatpush1.msra.mxu0 %v145
    %284 = vmatprep.subr.mxu0 0.0
    %285 = vmatpush1.msra.mxu0 %v146
    %286 = vmatprep.subr.mxu0 0.0
    %287 = vmatpush1.msra.mxu0 %v147
    %288 = vmatprep.subr.mxu0 0.0
    %289 = vmatpush1.msra.mxu0 %v148
    %290 = vmatprep.mubr.f32.mxu0 %v111
    %291 = vmatmul.mubr.f32.gmra.mrb[0].mxu0 %v110
    %v292 = vpop.f32.mrb[0].mxu0
    %v293 = vadd.f32 %v220, %v292
    %v294 = vpop.f32.mrb[0].mxu0
    %295 = vdwg.mxu0
    %296 = vmatprep.subr.mxu0 0.0
    %297 = vmatpush1.msra.mxu0 %v149
    %298 = vmatprep.subr.mxu0 0.0
    %299 = vmatpush1.msra.mxu0 %v150
    %300 = vmatprep.subr.mxu0 0.0
    %301 = vmatpush1.msra.mxu0 %v151
    %302 = vmatprep.subr.mxu0 0.0
    %303 = vmatpush1.msra.mxu0 %v152
    %304 = vmatprep.subr.mxu0 0.0
    %305 = vmatpush1.msra.mxu0 %v153
    %306 = vmatprep.subr.mxu0 0.0
    %307 = vmatpush1.msra.mxu0 %v154
    %308 = vmatprep.subr.mxu0 0.0
    %309 = vmatpush1.msra.mxu0 %v155
    %310 = vmatprep.subr.mxu0 0.0
    %311 = vmatpush1.msra.mxu0 %v156
    %312 = vmatprep.subr.mxu0 0.0
    %313 = vmatpush1.msra.mxu0 %v157
    %314 = vmatprep.subr.mxu0 0.0
    %315 = vmatpush1.msra.mxu0 %v158
    %316 = vmatprep.subr.mxu0 0.0
    %317 = vmatpush1.msra.mxu0 %v159
    %318 = vmatprep.subr.mxu0 0.0
    %319 = vmatpush1.msra.mxu0 %v160
    %320 = vmatprep.subr.mxu0 0.0
    %321 = vmatpush1.msra.mxu0 %v161
    %322 = vmatprep.subr.mxu0 0.0
    %323 = vmatpush1.msra.mxu0 %v162
    %324 = vmatprep.subr.mxu0 0.0
    %325 = vmatpush1.msra.mxu0 %v163
    %326 = vmatprep.subr.mxu0 0.0
    %327 = vmatpush1.msra.mxu0 %v164
    %328 = vmatprep.subr.mxu0 0.0
    %329 = vmatpush1.msra.mxu0 %v165
    %330 = vmatprep.subr.mxu0 0.0
    %331 = vmatpush1.msra.mxu0 %v166
    %332 = vmatprep.subr.mxu0 0.0
    %333 = vmatpush1.msra.mxu0 %v167
    %334 = vmatprep.subr.mxu0 0.0
    %335 = vmatpush1.msra.mxu0 %v168
    %336 = vmatprep.subr.mxu0 0.0
    %337 = vmatpush1.msra.mxu0 %v169
    %338 = vmatprep.subr.mxu0 0.0
    %339 = vmatpush1.msra.mxu0 %v170
    %340 = vmatprep.subr.mxu0 0.0
    %341 = vmatpush1.msra.mxu0 %v171
    %342 = vmatprep.subr.mxu0 0.0
    %343 = vmatpush1.msra.mxu0 %v172
    %344 = vmatprep.subr.mxu0 0.0
    %345 = vmatpush1.msra.mxu0 %v173
    %346 = vmatprep.subr.mxu0 0.0
    %347 = vmatpush1.msra.mxu0 %v174
    %348 = vmatprep.subr.mxu0 0.0
    %349 = vmatpush1.msra.mxu0 %v175
    %350 = vmatprep.subr.mxu0 0.0
    %351 = vmatpush1.msra.mxu0 %v176
    %352 = vmatprep.subr.mxu0 0.0
    %353 = vmatpush1.msra.mxu0 %v177
    %354 = vmatprep.subr.mxu0 0.0
    %355 = vmatpush1.msra.mxu0 %v178
    %356 = vmatprep.subr.mxu0 0.0
    %357 = vmatpush1.msra.mxu0 %v179
    %358 = vmatprep.subr.mxu0 0.0
    %359 = vmatpush1.msra.mxu0 %v180
    %360 = vmatprep.mubr.f32.mxu0 %v113
    %361 = vmatmul.mubr.f32.gmra.mrb[0].mxu0 %v112
    %v362 = vpop.f32.mrb[0].mxu0
    %v363 = vadd.f32 %v293, %v362
    %v364 = vpop.f32.mrb[0].mxu0
    %365 = vdwg.mxu0
    %366 = vmatprep.subr.mxu0 0.0
    %367 = vmatpush1.msra.mxu0 %v181
    %368 = vmatprep.subr.mxu0 0.0
    %369 = vmatpush1.msra.mxu0 %v182
    %370 = vmatprep.subr.mxu0 0.0
    %371 = vmatpush1.msra.mxu0 %v183
    %372 = vmatprep.subr.mxu0 0.0
    %373 = vmatpush1.msra.mxu0 %v184
    %374 = vmatprep.subr.mxu0 0.0
    %375 = vmatpush1.msra.mxu0 %v185
    %376 = vmatprep.subr.mxu0 0.0
    %377 = vmatpush1.msra.mxu0 %v186
    %378 = vmatprep.subr.mxu0 0.0
    %379 = vmatpush1.msra.mxu0 %v187
    %380 = vmatprep.subr.mxu0 0.0
    %381 = vmatpush1.msra.mxu0 %v188
    %382 = vmatprep.subr.mxu0 0.0
    %383 = vmatpush1.msra.mxu0 %v189
    %384 = vmatprep.subr.mxu0 0.0
    %385 = vmatpush1.msra.mxu0 %v190
    %386 = vmatprep.subr.mxu0 0.0
    %387 = vmatpush1.msra.mxu0 %v191
    %388 = vmatprep.subr.mxu0 0.0
    %389 = vmatpush1.msra.mxu0 %v192
    %390 = vmatprep.subr.mxu0 0.0
    %391 = vmatpush1.msra.mxu0 %v193
    %392 = vmatprep.subr.mxu0 0.0
    %393 = vmatpush1.msra.mxu0 %v194
    %394 = vmatprep.subr.mxu0 0.0
    %395 = vmatpush1.msra.mxu0 %v195
    %396 = vmatprep.subr.mxu0 0.0
    %397 = vmatpush1.msra.mxu0 %v196
    %398 = vmatprep.subr.mxu0 0.0
    %399 = vmatpush1.msra.mxu0 %v197
    %400 = vmatprep.subr.mxu0 0.0
    %401 = vmatpush1.msra.mxu0 %v198
    %402 = vmatprep.subr.mxu0 0.0
    %403 = vmatpush1.msra.mxu0 %v199
    %404 = vmatprep.subr.mxu0 0.0
    %405 = vmatpush1.msra.mxu0 %v200
    %406 = vmatprep.subr.mxu0 0.0
    %407 = vmatpush1.msra.mxu0 %v201
    %408 = vmatprep.subr.mxu0 0.0
    %409 = vmatpush1.msra.mxu0 %v202
    %410 = vmatprep.subr.mxu0 0.0
    %411 = vmatpush1.msra.mxu0 %v203
    %412 = vmatprep.subr.mxu0 0.0
    %413 = vmatpush1.msra.mxu0 %v204
    %414 = vmatprep.subr.mxu0 0.0
    %415 = vmatpush1.msra.mxu0 %v205
    %416 = vmatprep.subr.mxu0 0.0
    %417 = vmatpush1.msra.mxu0 %v206
    %418 = vmatprep.subr.mxu0 0.0
    %419 = vmatpush1.msra.mxu0 %v207
    %420 = vmatprep.subr.mxu0 0.0
    %421 = vmatpush1.msra.mxu0 %v208
    %422 = vmatprep.subr.mxu0 0.0
    %423 = vmatpush1.msra.mxu0 %v209
    %424 = vmatprep.subr.mxu0 0.0
    %425 = vmatpush1.msra.mxu0 %v210
    %426 = vmatprep.subr.mxu0 0.0
    %427 = vmatpush1.msra.mxu0 %v211
    %428 = vmatprep.subr.mxu0 0.0
    %429 = vmatpush1.msra.mxu0 %v212
    %430 = vmatprep.mubr.f32.mxu0 %v115
    %431 = vmatmul.mubr.f32.gmra.mrb[0].mxu0 %v114
    %v432 = vpop.f32.mrb[0].mxu0
    %v433 = vadd.f32 %v363, %v432
    %v434 = vpop.f32.mrb[0].mxu0
    %435 = vdwg.mxu0
    %436 = vmatprep.subr.mxu0 0.0
    %437 = vmatpush1.msra.mxu0 %v213
    %438 = vmatprep.subr.mxu0 0.0
    %439 = vmatpush1.msra.mxu0 %v214
    %440 = vmatprep.subr.mxu0 0.0
    %441 = vmatpush1.msra.mxu0 0.0
    %442 = vmatprep.subr.mxu0 0.0
    %443 = vmatpush1.msra.mxu0 0.0
    %444 = vmatprep.subr.mxu0 0.0
    %445 = vmatpush1.msra.mxu0 0.0
    %446 = vmatprep.subr.mxu0 0.0
    %447 = vmatpush1.msra.mxu0 0.0
    %448 = vmatprep.subr.mxu0 0.0
    %449 = vmatpush1.msra.mxu0 0.0
    %450 = vmatprep.subr.mxu0 0.0
    %451 = vmatpush1.msra.mxu0 0.0
    %452 = vmatprep.subr.mxu0 0.0
    %453 = vmatpush1.msra.mxu0 0.0
    %454 = vmatprep.subr.mxu0 0.0
    %455 = vmatpush1.msra.mxu0 0.0
    %456 = vmatprep.subr.mxu0 0.0
    %457 = vmatpush1.msra.mxu0 0.0
    %458 = vmatprep.subr.mxu0 0.0
    %459 = vmatpush1.msra.mxu0 0.0
    %460 = vmatprep.subr.mxu0 0.0
    %461 = vmatpush1.msra.mxu0 0.0
    %462 = vmatprep.subr.mxu0 0.0
    %463 = vmatpush1.msra.mxu0 0.0
    %464 = vmatprep.subr.mxu0 0.0
    %465 = vmatpush1.msra.mxu0 0.0
    %466 = vmatprep.subr.mxu0 0.0
    %467 = vmatpush1.msra.mxu0 0.0
    %468 = vmatprep.subr.mxu0 0.0
    %469 = vmatpush1.msra.mxu0 0.0
    %470 = vmatprep.subr.mxu0 0.0
    %471 = vmatpush1.msra.mxu0 0.0
    %472 = vmatprep.subr.mxu0 0.0
    %473 = vmatpush1.msra.mxu0 0.0
    %474 = vmatprep.subr.mxu0 0.0
    %475 = vmatpush1.msra.mxu0 0.0
    %476 = vmatprep.subr.mxu0 0.0
    %477 = vmatpush1.msra.mxu0 0.0
    %478 = vmatprep.subr.mxu0 0.0
    %479 = vmatpush1.msra.mxu0 0.0
    %480 = vmatprep.subr.mxu0 0.0
    %481 = vmatpush1.msra.mxu0 0.0
    %482 = vmatprep.subr.mxu0 0.0
    %483 = vmatpush1.msra.mxu0 0.0
    %484 = vmatprep.subr.mxu0 0.0
    %485 = vmatpush1.msra.mxu0 0.0
    %486 = vmatprep.subr.mxu0 0.0
    %487 = vmatpush1.msra.mxu0 0.0
    %488 = vmatprep.subr.mxu0 0.0
    %489 = vmatpush1.msra.mxu0 0.0
    %490 = vmatprep.subr.mxu0 0.0
    %491 = vmatpush1.msra.mxu0 0.0
    %492 = vmatprep.subr.mxu0 0.0
    %493 = vmatpush1.msra.mxu0 0.0
    %494 = vmatprep.subr.mxu0 0.0
    %495 = vmatpush1.msra.mxu0 0.0
    %496 = vmatprep.subr.mxu0 0.0
    %497 = vmatpush1.msra.mxu0 0.0
    %498 = vmatprep.subr.mxu0 0.0
    %499 = vmatpush1.msra.mxu0 0.0
    %500 = vmatprep.mubr.f32.mxu0 0.0
    %501 = vmatmul.mubr.f32.gmra.mrb[0].mxu0 %v224
    %v502 = vpop.f32.mrb[0].mxu0
    %v503 = vadd.f32 %v433, %v502
    %v504 = vpop.f32.mrb[0].mxu0
    %505 = vdwg.mxu0
    %v506 = vld [vmem:[#allocation7] sm:$0xff]
    %v507 = vld [vmem:[#allocation7 + $0x8] sm:$0xff]
    %v508 = vld [vmem:[#allocation7 + $0x10] sm:$0xff]
    %v509 = vld [vmem:[#allocation7 + $0x18] sm:$0xff]
    %v510 = vld [vmem:[#allocation7 + $0x20] sm:$0xff]
    %v511 = vld [vmem:[#allocation7 + $0x28] sm:$0xff]
    %v512 = vld [vmem:[#allocation7 + $0x30] sm:$0xff]
    %v513 = vld [vmem:[#allocation7 + $0x38] sm:$0xff]
    %v514 = vld [vmem:[#allocation7 + $0x40] sm:$0xff]
    %v515 = vld [vmem:[#allocation7 + $0x48] sm:$0xff]
    %v516 = vld [vmem:[#allocation7 + $0x50] sm:$0xff]
    %v517 = vld [vmem:[#allocation7 + $0x58] sm:$0xff]
    %v518 = vld [vmem:[#allocation7 + $0x60] sm:$0xff]
    %v519 = vld [vmem:[#allocation7 + $0x68] sm:$0xff]
    %v520 = vld [vmem:[#allocation7 + $0x70] sm:$0xff]
    %v521 = vld [vmem:[#allocation7 + $0x78] sm:$0xff]
    %522 = vmatprep.subr.mxu0 0.0
    %523 = vmatpush1.msra.mxu0 %v506
    %524 = vmatprep.subr.mxu0 0.0
    %525 = vmatpush1.msra.mxu0 %v507
    %526 = vmatprep.subr.mxu0 0.0
    %527 = vmatpush1.msra.mxu0 %v508
    %528 = vmatprep.subr.mxu0 0.0
    %529 = vmatpush1.msra.mxu0 %v509
    %530 = vmatprep.subr.mxu0 0.0
    %531 = vmatpush1.msra.mxu0 %v510
    %532 = vmatprep.subr.mxu0 0.0
    %533 = vmatpush1.msra.mxu0 %v511
    %534 = vmatprep.subr.mxu0 0.0
    %535 = vmatpush1.msra.mxu0 %v512
    %536 = vmatprep.subr.mxu0 0.0
    %537 = vmatpush1.msra.mxu0 %v513
    %538 = vmatprep.subr.mxu0 0.0
    %539 = vmatpush1.msra.mxu0 %v514
    %540 = vmatprep.subr.mxu0 0.0
    %541 = vmatpush1.msra.mxu0 %v515
    %542 = vmatprep.subr.mxu0 0.0
    %543 = vmatpush1.msra.mxu0 %v516
    %544 = vmatprep.subr.mxu0 0.0
    %545 = vmatpush1.msra.mxu0 %v517
    %546 = vmatprep.subr.mxu0 0.0
    %547 = vmatpush1.msra.mxu0 %v518
    %548 = vmatprep.subr.mxu0 0.0
    %549 = vmatpush1.msra.mxu0 %v519
    %550 = vmatprep.subr.mxu0 0.0
    %551 = vmatpush1.msra.mxu0 %v520
    %552 = vmatprep.subr.mxu0 0.0
    %553 = vmatpush1.msra.mxu0 %v521
    %554 = vmatprep.subr.mxu0 0.0
    %555 = vmatpush1.msra.mxu0 0.0
    %556 = vmatprep.subr.mxu0 0.0
    %557 = vmatpush1.msra.mxu0 0.0
    %558 = vmatprep.subr.mxu0 0.0
    %559 = vmatpush1.msra.mxu0 0.0
    %560 = vmatprep.subr.mxu0 0.0
    %561 = vmatpush1.msra.mxu0 0.0
    %562 = vmatprep.subr.mxu0 0.0
    %563 = vmatpush1.msra.mxu0 0.0
    %564 = vmatprep.subr.mxu0 0.0
    %565 = vmatpush1.msra.mxu0 0.0
    %566 = vmatprep.subr.mxu0 0.0
    %567 = vmatpush1.msra.mxu0 0.0
    %568 = vmatprep.subr.mxu0 0.0
    %569 = vmatpush1.msra.mxu0 0.0
    %570 = vmatprep.subr.mxu0 0.0
    %571 = vmatpush1.msra.mxu0 0.0
    %572 = vmatprep.subr.mxu0 0.0
    %573 = vmatpush1.msra.mxu0 0.0
    %574 = vmatprep.subr.mxu0 0.0
    %575 = vmatpush1.msra.mxu0 0.0
    %576 = vmatprep.subr.mxu0 0.0
    %577 = vmatpush1.msra.mxu0 0.0
    %578 = vmatprep.subr.mxu0 0.0
    %579 = vmatpush1.msra.mxu0 0.0
    %580 = vmatprep.subr.mxu0 0.0
    %581 = vmatpush1.msra.mxu0 0.0
    %582 = vmatprep.subr.mxu0 0.0
    %583 = vmatpush1.msra.mxu0 0.0
    %584 = vmatprep.subr.mxu0 0.0
    %585 = vmatpush1.msra.mxu0 0.0
    %586 = vmatprep.mubr.f32.mxu0 0.0
    %587 = vmatmul.mubr.f32.gmra.mrb[0].mxu0 %v503
    %v588 = vpop.f32.mrb[0].mxu0
    %v589 = vadd.f32 0.0, %v588
    %v590 = vpop.f32.mrb[0].mxu0
    %591 = vdwg.mxu0
    %v592 = vmul.f32 %v589, 0.5
    %v593 = vtanh.pop %v592
    %v594 = vmul.f32 %v593, 0.5
    %v595 = vadd.f32 %v594, 0.5
    %v596 = vld [vmem:[#allocation8] sm:$0xff]
    %v597 = vld [vmem:[#allocation8 + $0x8] sm:$0xff]
    %v598 = vld [vmem:[#allocation8 + $0x10] sm:$0xff]
    %v599 = vld [vmem:[#allocation8 + $0x18] sm:$0xff]
    %v600 = vld [vmem:[#allocation8 + $0x20] sm:$0xff]
    %v601 = vld [vmem:[#allocation8 + $0x28] sm:$0xff]
    %v602 = vld [vmem:[#allocation8 + $0x30] sm:$0xff]
    %v603 = vld [vmem:[#allocation8 + $0x38] sm:$0xff]
    %v604 = vld [vmem:[#allocation8 + $0x40] sm:$0xff]
    %v605 = vld [vmem:[#allocation8 + $0x48] sm:$0xff]
    %v606 = vld [vmem:[#allocation8 + $0x50] sm:$0xff]
    %v607 = vld [vmem:[#allocation8 + $0x58] sm:$0xff]
    %v608 = vld [vmem:[#allocation8 + $0x60] sm:$0xff]
    %v609 = vld [vmem:[#allocation8 + $0x68] sm:$0xff]
    %v610 = vld [vmem:[#allocation8 + $0x70] sm:$0xff]
    %v611 = vld [vmem:[#allocation8 + $0x78] sm:$0xff]
    %v612 = vld [vmem:[%s5] sm:$0x1]
    %v614 = vlaneseq
    %v615 = vshrl.u32 %v614, 7
    %v616 = vsub.s32 0, %v615
    %v617 = vrot.slane %v612, %v616
    %619 = vmatprep.subr.mxu0 0.0
    %620 = vmatpush1.msra.mxu0 %v596
    %621 = vmatprep.subr.mxu0 0.0
    %622 = vmatpush1.msra.mxu0 %v597
    %623 = vmatprep.subr.mxu0 0.0
    %624 = vmatpush1.msra.mxu0 %v598
    %625 = vmatprep.subr.mxu0 0.0
    %626 = vmatpush1.msra.mxu0 %v599
    %627 = vmatprep.subr.mxu0 0.0
    %628 = vmatpush1.msra.mxu0 %v600
    %629 = vmatprep.subr.mxu0 0.0
    %630 = vmatpush1.msra.mxu0 %v601
    %631 = vmatprep.subr.mxu0 0.0
    %632 = vmatpush1.msra.mxu0 %v602
    %633 = vmatprep.subr.mxu0 0.0
    %634 = vmatpush1.msra.mxu0 %v603
    %635 = vmatprep.subr.mxu0 0.0
    %636 = vmatpush1.msra.mxu0 %v604
    %637 = vmatprep.subr.mxu0 0.0
    %638 = vmatpush1.msra.mxu0 %v605
    %639 = vmatprep.subr.mxu0 0.0
    %640 = vmatpush1.msra.mxu0 %v606
    %641 = vmatprep.subr.mxu0 0.0
    %642 = vmatpush1.msra.mxu0 %v607
    %643 = vmatprep.subr.mxu0 0.0
    %644 = vmatpush1.msra.mxu0 %v608
    %645 = vmatprep.subr.mxu0 0.0
    %646 = vmatpush1.msra.mxu0 %v609
    %647 = vmatprep.subr.mxu0 0.0
    %648 = vmatpush1.msra.mxu0 %v610
    %649 = vmatprep.subr.mxu0 0.0
    %650 = vmatpush1.msra.mxu0 %v611
    %651 = vmatprep.subr.mxu0 0.0
    %652 = vmatpush1.msra.mxu0 0.0
    %653 = vmatprep.subr.mxu0 0.0
    %654 = vmatpush1.msra.mxu0 0.0
    %655 = vmatprep.subr.mxu0 0.0
    %656 = vmatpush1.msra.mxu0 0.0
    %657 = vmatprep.subr.mxu0 0.0
    %658 = vmatpush1.msra.mxu0 0.0
    %659 = vmatprep.subr.mxu0 0.0
    %660 = vmatpush1.msra.mxu0 0.0
    %661 = vmatprep.subr.mxu0 0.0
    %662 = vmatpush1.msra.mxu0 0.0
    %663 = vmatprep.subr.mxu0 0.0
    %664 = vmatpush1.msra.mxu0 0.0
    %665 = vmatprep.subr.mxu0 0.0
    %666 = vmatpush1.msra.mxu0 0.0
    %667 = vmatprep.subr.mxu0 0.0
    %668 = vmatpush1.msra.mxu0 0.0
    %669 = vmatprep.subr.mxu0 0.0
    %670 = vmatpush1.msra.mxu0 0.0
    %671 = vmatprep.subr.mxu0 0.0
    %672 = vmatpush1.msra.mxu0 0.0
    %673 = vmatprep.subr.mxu0 0.0
    %674 = vmatpush1.msra.mxu0 0.0
    %675 = vmatprep.subr.mxu0 0.0
    %676 = vmatpush1.msra.mxu0 0.0
    %677 = vmatprep.subr.mxu0 0.0
    %678 = vmatpush1.msra.mxu0 0.0
    %679 = vmatprep.subr.mxu0 0.0
    %680 = vmatpush1.msra.mxu0 0.0
    %681 = vmatprep.subr.mxu0 0.0
    %682 = vmatpush1.msra.mxu0 0.0
    %683 = vmatprep.mubr.f32.mxu0 0.0
    %684 = vmatmul.mubr.f32.gmra.mrb[0].mxu0 %v595
    %v685 = vpop.f32.mrb[0].mxu0
    %v686 = vadd.f32 %v617, %v685
    %v687 = vpop.f32.mrb[0].mxu0
    %688 = vdwg.mxu0
    %v689 = vmul.f32 %v686, 0.5
    %v690 = vtanh.pop %v689
    %v691 = vmul.f32 %v690, 0.5
    %v692 = vadd.f32 %v691, 0.5
    %v693 = vld [vmem:[#allocation10] sm:$0xff]
    %v694 = vld [vmem:[#allocation10 + $0x8] sm:$0xff]
    %v695 = vld [vmem:[#allocation10 + $0x10] sm:$0xff]
    %v696 = vld [vmem:[#allocation10 + $0x18] sm:$0xff]
    %v697 = vld [vmem:[#allocation10 + $0x20] sm:$0xff]
    %v698 = vld [vmem:[#allocation10 + $0x28] sm:$0xff]
    %v699 = vld [vmem:[#allocation10 + $0x30] sm:$0xff]
    %v700 = vld [vmem:[#allocation10 + $0x38] sm:$0xff]
    %v701 = vld [vmem:[#allocation10 + $0x40] sm:$0xff]
    %v702 = vld [vmem:[#allocation10 + $0x48] sm:$0xff]
    %v703 = vld [vmem:[#allocation10 + $0x50] sm:$0xff]
    %v704 = vld [vmem:[#allocation10 + $0x58] sm:$0xff]
    %v705 = vld [vmem:[#allocation10 + $0x60] sm:$0xff]
    %v706 = vld [vmem:[#allocation10 + $0x68] sm:$0xff]
    %v707 = vld [vmem:[#allocation10 + $0x70] sm:$0xff]
    %v708 = vld [vmem:[#allocation10 + $0x78] sm:$0xff]
    %709 = vmatprep.subr.mxu0 0.0
    %710 = vmatpush1.msra.mxu0 %v693
    %711 = vmatprep.subr.mxu0 0.0
    %712 = vmatpush1.msra.mxu0 %v694
    %713 = vmatprep.subr.mxu0 0.0
    %714 = vmatpush1.msra.mxu0 %v695
    %715 = vmatprep.subr.mxu0 0.0
    %716 = vmatpush1.msra.mxu0 %v696
    %717 = vmatprep.subr.mxu0 0.0
    %718 = vmatpush1.msra.mxu0 %v697
    %719 = vmatprep.subr.mxu0 0.0
    %720 = vmatpush1.msra.mxu0 %v698
    %721 = vmatprep.subr.mxu0 0.0
    %722 = vmatpush1.msra.mxu0 %v699
    %723 = vmatprep.subr.mxu0 0.0
    %724 = vmatpush1.msra.mxu0 %v700
    %725 = vmatprep.subr.mxu0 0.0
    %726 = vmatpush1.msra.mxu0 %v701
    %727 = vmatprep.subr.mxu0 0.0
    %728 = vmatpush1.msra.mxu0 %v702
    %729 = vmatprep.subr.mxu0 0.0
    %730 = vmatpush1.msra.mxu0 %v703
    %731 = vmatprep.subr.mxu0 0.0
    %732 = vmatpush1.msra.mxu0 %v704
    %733 = vmatprep.subr.mxu0 0.0
    %734 = vmatpush1.msra.mxu0 %v705
    %735 = vmatprep.subr.mxu0 0.0
    %736 = vmatpush1.msra.mxu0 %v706
    %737 = vmatprep.subr.mxu0 0.0
    %738 = vmatpush1.msra.mxu0 %v707
    %739 = vmatprep.subr.mxu0 0.0
    %740 = vmatpush1.msra.mxu0 %v708
    %741 = vmatprep.subr.mxu0 0.0
    %742 = vmatpush1.msra.mxu0 0.0
    %743 = vmatprep.subr.mxu0 0.0
    %744 = vmatpush1.msra.mxu0 0.0
    %745 = vmatprep.subr.mxu0 0.0
    %746 = vmatpush1.msra.mxu0 0.0
    %747 = vmatprep.subr.mxu0 0.0
    %748 = vmatpush1.msra.mxu0 0.0
    %749 = vmatprep.subr.mxu0 0.0
    %750 = vmatpush1.msra.mxu0 0.0
    %751 = vmatprep.subr.mxu0 0.0
    %752 = vmatpush1.msra.mxu0 0.0
    %753 = vmatprep.subr.mxu0 0.0
    %754 = vmatpush1.msra.mxu0 0.0
    %755 = vmatprep.subr.mxu0 0.0
    %756 = vmatpush1.msra.mxu0 0.0
    %757 = vmatprep.subr.mxu0 0.0
    %758 = vmatpush1.msra.mxu0 0.0
    %759 = vmatprep.subr.mxu0 0.0
    %760 = vmatpush1.msra.mxu0 0.0
    %761 = vmatprep.subr.mxu0 0.0
    %762 = vmatpush1.msra.mxu0 0.0
    %763 = vmatprep.subr.mxu0 0.0
    %764 = vmatpush1.msra.mxu0 0.0
    %765 = vmatprep.subr.mxu0 0.0
    %766 = vmatpush1.msra.mxu0 0.0
    %767 = vmatprep.subr.mxu0 0.0
    %768 = vmatpush1.msra.mxu0 0.0
    %769 = vmatprep.subr.mxu0 0.0
    %770 = vmatpush1.msra.mxu0 0.0
    %771 = vmatprep.subr.mxu0 0.0
    %772 = vmatpush1.msra.mxu0 0.0
    %773 = vmatprep.mubr.f32.mxu0 0.0
    %774 = vmatmul.mubr.f32.gmra.mrb[0].mxu0 %v692
    %v775 = vpop.f32.mrb[0].mxu0
    %v776 = vadd.f32 0.0, %v775
    %v777 = vpop.f32.mrb[0].mxu0
    %778 = vdwg.mxu0
    %v779 = vmul.f32 %v776, 0.5
    %v780 = vtanh.pop %v779
    %v781 = vmul.f32 %v780, 0.5
    %v782 = vadd.f32 %v781, 0.5
    %v783 = vld [vmem:[#allocation11] sm:$0xff]
    %v784 = vld [vmem:[#allocation11 + $0x8] sm:$0xff]
    %v785 = vld [vmem:[#allocation11 + $0x10] sm:$0xff]
    %v786 = vld [vmem:[#allocation11 + $0x18] sm:$0xff]
    %v787 = vld [vmem:[#allocation11 + $0x20] sm:$0xff]
    %v788 = vld [vmem:[#allocation11 + $0x28] sm:$0xff]
    %v789 = vld [vmem:[#allocation11 + $0x30] sm:$0xff]
    %v790 = vld [vmem:[#allocation11 + $0x38] sm:$0xff]
    %v791 = vld [vmem:[#allocation11 + $0x40] sm:$0xff]
    %v792 = vld [vmem:[#allocation11 + $0x48] sm:$0xff]
    %v793 = vld [vmem:[#allocation11 + $0x50] sm:$0xff]
    %v794 = vld [vmem:[#allocation11 + $0x58] sm:$0xff]
    %v795 = vld [vmem:[#allocation11 + $0x60] sm:$0xff]
    %v796 = vld [vmem:[#allocation11 + $0x68] sm:$0xff]
    %v797 = vld [vmem:[#allocation11 + $0x70] sm:$0xff]
    %v798 = vld [vmem:[#allocation11 + $0x78] sm:$0xff]
    %799 = vmatprep.subr.mxu0 0.0
    %800 = vmatpush1.msra.mxu0 %v783
    %801 = vmatprep.subr.mxu0 0.0
    %802 = vmatpush1.msra.mxu0 %v784
    %803 = vmatprep.subr.mxu0 0.0
    %804 = vmatpush1.msra.mxu0 %v785
    %805 = vmatprep.subr.mxu0 0.0
    %806 = vmatpush1.msra.mxu0 %v786
    %807 = vmatprep.subr.mxu0 0.0
    %808 = vmatpush1.msra.mxu0 %v787
    %809 = vmatprep.subr.mxu0 0.0
    %810 = vmatpush1.msra.mxu0 %v788
    %811 = vmatprep.subr.mxu0 0.0
    %812 = vmatpush1.msra.mxu0 %v789
    %813 = vmatprep.subr.mxu0 0.0
    %814 = vmatpush1.msra.mxu0 %v790
    %815 = vmatprep.subr.mxu0 0.0
    %816 = vmatpush1.msra.mxu0 %v791
    %817 = vmatprep.subr.mxu0 0.0
    %818 = vmatpush1.msra.mxu0 %v792
    %819 = vmatprep.subr.mxu0 0.0
    %820 = vmatpush1.msra.mxu0 %v793
    %821 = vmatprep.subr.mxu0 0.0
    %822 = vmatpush1.msra.mxu0 %v794
    %823 = vmatprep.subr.mxu0 0.0
    %824 = vmatpush1.msra.mxu0 %v795
    %825 = vmatprep.subr.mxu0 0.0
    %826 = vmatpush1.msra.mxu0 %v796
    %827 = vmatprep.subr.mxu0 0.0
    %828 = vmatpush1.msra.mxu0 %v797
    %829 = vmatprep.subr.mxu0 0.0
    %830 = vmatpush1.msra.mxu0 %v798
    %831 = vmatprep.subr.mxu0 0.0
    %832 = vmatpush1.msra.mxu0 0.0
    %833 = vmatprep.subr.mxu0 0.0
    %834 = vmatpush1.msra.mxu0 0.0
    %835 = vmatprep.subr.mxu0 0.0
    %836 = vmatpush1.msra.mxu0 0.0
    %837 = vmatprep.subr.mxu0 0.0
    %838 = vmatpush1.msra.mxu0 0.0
    %839 = vmatprep.subr.mxu0 0.0
    %840 = vmatpush1.msra.mxu0 0.0
    %841 = vmatprep.subr.mxu0 0.0
    %842 = vmatpush1.msra.mxu0 0.0
    %843 = vmatprep.subr.mxu0 0.0
    %844 = vmatpush1.msra.mxu0 0.0
    %845 = vmatprep.subr.mxu0 0.0
    %846 = vmatpush1.msra.mxu0 0.0
    %847 = vmatprep.subr.mxu0 0.0
    %848 = vmatpush1.msra.mxu0 0.0
    %849 = vmatprep.subr.mxu0 0.0
    %850 = vmatpush1.msra.mxu0 0.0
    %851 = vmatprep.subr.mxu0 0.0
    %852 = vmatpush1.msra.mxu0 0.0
    %853 = vmatprep.subr.mxu0 0.0
    %854 = vmatpush1.msra.mxu0 0.0
    %855 = vmatprep.subr.mxu0 0.0
    %856 = vmatpush1.msra.mxu0 0.0
    %857 = vmatprep.subr.mxu0 0.0
    %858 = vmatpush1.msra.mxu0 0.0
    %859 = vmatprep.subr.mxu0 0.0
    %860 = vmatpush1.msra.mxu0 0.0
    %861 = vmatprep.subr.mxu0 0.0
    %862 = vmatpush1.msra.mxu0 0.0
    %863 = vmatprep.mubr.f32.mxu0 0.0
    %864 = vmatmul.mubr.f32.gmra.mrb[0].mxu0 %v782
    %v865 = vpop.f32.mrb[0].mxu0
    %v866 = vadd.f32 0.0, %v865
    %v867 = vpop.f32.mrb[0].mxu0
    %868 = vdwg.mxu0
    %v869 = vlaneseq
    %v870 = vand.u32 %v869, 127
    %vm871 = vcmp.lt.s32.totalorder %v870, 10
    %v872 = vsel %vm871, %v866, -1e+30
    %873 = vmax.xlane.f32.xlu0 %v872
    %v874 = vpop.xlane.xlu0 %873
    %v875 = vsub.f32 %v872, %v874
    %v876 = vmul.f32 %v875, 1.442695
    %v877 = vpow.pop %v876
    %878 = vadd.xlane.f32.xlu0 %v877
    %v879 = vpop.xlane.xlu0 %878
    %v880 = vlog2.pop %v879
    %v881 = vmul.f32 %v880, 0.6931472
    %v882 = vsub.f32 %v875, %v881
    %vm883 = vcmask 80896
    %884 = vst.msk [vmem:[#allocation13] sm:$0xff] %vm883, %v882
    // Predicated region
    $region58: #{tpu_custom_call.1} parent=1 // pred_check
      _
    $region59: #{tpu_custom_call.1} parent=1 // pred_check_branch
      %886 = sbr.rel (0) target = $region61
    $region60: #{tpu_custom_call.1} parent=1 // pred_region
      %s888 = ssub.s32 128, 128
      %889 = vsyncadd [#allocation4], %s888
      %s891 = sshll.u32 [#allocation13], 4
      %s892 = int_to_ptr.vmem [resolvable:$true] %s891
      %894 = dma.vmem_to_hbm [thread:$0]  %s892, 128, %s8, [#allocation4]
    $region61: #{tpu_custom_call.1} parent=1 // pred_fallthru
      _
    // Predicated region
    $region62: #{tpu_custom_call.1} parent=1 // pred_check
      _
    $region63: #{tpu_custom_call.1} parent=1 // pred_check_branch
      %896 = sbr.rel (0) target = $region65
    $region64: #{tpu_custom_call.1} parent=1 // pred_region
      %897 = dma.done [#allocation4], 128
    $region65: #{tpu_custom_call.1} parent=1 // pred_fallthru
      _
    %898 = vsyncpa [#allocation3], 1
    %899 = vsyncpa [#allocation6], 1
    %900 = vsyncpa [#allocation9], 1
    %901 = vsyncpa [#allocation12], 1
    %902 = vsyncpa [#allocation4], 1

</llo_original>
